<compile_context>
chip_gen: v7x
topology: tpu7x:2x2x1
jax: 0.10.0
libtpu: 0.0.40
codegen_flags: <defaults>
</compile_context>

<pallas_src>
import functools

import jax
import jax.numpy as jnp
import numpy as np
from jax.experimental import pallas as pl
from jax.experimental.pallas import tpu as pltpu


def ghost_kernel(x_ref, w_ref, mask_ref, out_ref, *, c_in):
    """One lane-dense slab.

    x_ref:    (C_in, LT)       input block, LT = bt * n_pts (whole batches).
    w_ref:    (C_out_p, C_in+5) packed constants:
              [ w1*s1 (row-duplicated) | b1 | tapL | tapC | tapR | b2 ].
    mask_ref: (2, LT)          row 0: 0.0 at left batch edges, row 1: right.
    out_ref:  (C_out_p, LT)    output slab in final row order.
    """
    x = x_ref[...]                               # (C_in, LT)
    w = w_ref[...]                               # (C_out_p, C_in + 5)
    w1 = w[:, :c_in]                             # BN1-folded primary weights
    b1 = w[:, c_in:c_in + 1]
    t_l = w[:, c_in + 1:c_in + 2]                # depthwise taps (BN2-folded;
    t_c = w[:, c_in + 2:c_in + 3]                #  (0,1,0) for primary rows)
    t_r = w[:, c_in + 3:c_in + 4]
    b2 = w[:, c_in + 4:c_in + 5]
    m_l = mask_ref[0:1, :]                       # (1, LT)
    m_r = mask_ref[1:2, :]                       # (1, LT)

    # ---- primary 1x1 conv + BN1 + ReLU: one wide MXU matmul ----
    # Row duplication in w1 means y is already in final output row layout.
    y = jnp.dot(w1, x, preferred_element_type=jnp.float32) + b1
    y = jnp.maximum(y, 0.0)                      # (C_out_p, LT)

    # ---- depthwise k=3 conv + BN2 + ReLU (pass-through for primary rows) ----
    # +-1 lane shifts on the XLU; batch-boundary zero-padding via edge masks.
    lt = y.shape[1]
    y_m1 = m_l * pltpu.roll(y, 1, axis=1)        # y[:, n-1]
    y_p1 = m_r * pltpu.roll(y, lt - 1, axis=1)   # y[:, n+1]
    out = jnp.maximum(t_l * y_m1 + t_c * y + t_r * y_p1 + b2, 0.0)

    # ---- single unmasked, lane-dense full-tile store ----
    out_ref[...] = out.astype(out_ref.dtype)


def _round_up(v, m):
    return -(-v // m) * m


def _vmem_capacity_bytes():
    try:
        return int(pltpu.get_tpu_info().vmem_capacity_bytes)
    except Exception:
        return 64 << 20  # conservative (v7x per-TensorCore)


def _num_tensorcores():
    try:
        info = pltpu.get_tpu_info()
        for attr in ("num_cores", "num_tensorcores", "core_count"):
            v = getattr(info, attr, None)
            if v:
                return int(v)
    except Exception:
        pass
    try:
        v = getattr(jax.devices()[0], "num_cores", None)
        if v:
            return int(v)
    except Exception:
        pass
    return 1


def _step_footprint_bytes(bt, n_pts, c_in, c_out_p, itemsize):
    lt = bt * n_pts
    # double-buffered input + double-buffered output + ~4 f32 temporaries
    return lt * (2 * c_in * itemsize + 2 * c_out_p * itemsize + 4 * c_out_p * 4)


def _pick_batches_per_block(B, n_pts, c_in, c_out_p, itemsize, num_cores, vmem_bytes):
    """Largest legal block under a per-generation VMEM budget.  Single-TC
    chips (v5e/v6e) minimize grid steps; 2-TC chips prefer even >=2 steps."""
    budget = max(1 << 20, min(vmem_bytes // 4, 64 << 20))
    legal = [bt for bt in range(1, B + 1)
             if B % bt == 0 and (bt == B or (bt * n_pts) % 128 == 0)]
    fitting = [bt for bt in legal
               if _step_footprint_bytes(bt, n_pts, c_in, c_out_p, itemsize) <= budget]
    if not fitting:
        # TODO(synk): intra-batch (N-axis) tiling with a 1-column halo for
        # sequences that overflow VMEM even at one batch per block.
        return min(legal)
    if num_cores >= 2 and B >= 2:
        even = [bt for bt in fitting if (B // bt) >= 2 and (B // bt) % 2 == 0]
        if even:
            return max(even)
    return max(fitting)


def ghost_module(x, w1, s1, b1, wdw, s2, b2):
    """x: (B, C_in, N); w1: (init, C_in); s*/b*: folded BN scale/shift (column
    vectors of shape (init,1)/(cheap,1)).  Output: (B, C_in, N)."""
    B, C_in, N = x.shape
    init = w1.shape[0]
    cheap = wdw.shape[0]
    if cheap > 0:
        assert cheap % init == 0, "grouped conv needs cheap % init == 0"
    n_x1 = min(init, C_in)
    n_x2 = C_in - n_x1
    assert n_x2 <= max(init, cheap), "output slice needs enough ghost channels"
    c_out_p = max(8, _round_up(C_in, 8))

    # ---- host-side constant packing: one (C_out_p, C_in + 5) block ----
    w1s = (w1 * s1).astype(jnp.float32)          # BN1 scale folded into weights
    taps = (wdw * s2).astype(jnp.float32)        # BN2 scale folded into dw taps
    b1f = b1.astype(jnp.float32)
    b2f = b2.astype(jnp.float32)
    k = (cheap // init) if cheap > 0 else 1      # outputs per group

    zero_w = jnp.zeros((C_in,), jnp.float32)
    zero1 = jnp.zeros((1,), jnp.float32)
    zero3 = jnp.zeros((3,), jnp.float32)
    pass_t = jnp.array([0.0, 1.0, 0.0], jnp.float32)

    rows_w, rows_b1, rows_t, rows_b2 = [], [], [], []
    for r in range(c_out_p):
        if r < n_x1:                                     # primary (x1) rows
            rows_w.append(w1s[r]); rows_b1.append(b1f[r])
            rows_t.append(pass_t); rows_b2.append(zero1)
        elif r < C_in:                                   # cheap (x2) rows
            j = r - n_x1
            if j < cheap:
                src = j // k                             # x1 channel feeding group
                rows_w.append(w1s[src]); rows_b1.append(b1f[src])
                rows_t.append(taps[j]); rows_b2.append(b2f[j])
            else:                                        # F.pad zero channels
                rows_w.append(zero_w); rows_b1.append(zero1)
                rows_t.append(zero3); rows_b2.append(zero1)
        else:                                            # sublane padding rows
            rows_w.append(zero_w); rows_b1.append(zero1)
            rows_t.append(zero3); rows_b2.append(zero1)

    const = jnp.concatenate(
        [jnp.stack(rows_w), jnp.stack(rows_b1), jnp.stack(rows_t), jnp.stack(rows_b2)],
        axis=1)                                          # (C_out_p, C_in + 5)

    # ---- block sizing (per-generation VMEM budget, core-aware grid) ----
    itemsize = jnp.dtype(x.dtype).itemsize
    vmem_cap = _vmem_capacity_bytes()
    bt = _pick_batches_per_block(B, N, C_in, c_out_p, itemsize,
                                 _num_tensorcores(), vmem_cap)
    lt = bt * N
    grid = (B // bt,)
    fp = _step_footprint_bytes(bt, N, C_in, c_out_p, itemsize)
    vmem_limit = int(min(vmem_cap // 2, max(32 << 20, 2 * fp)))

    # ---- host-side edge masks (identical for every block) ----
    pos = jnp.arange(lt, dtype=jnp.int32) % N
    mask = jnp.stack([(pos != 0).astype(jnp.float32),
                      (pos != N - 1).astype(jnp.float32)], axis=0)   # (2, lt)

    # ---- lane-dense relayout: (B, C_in, N) -> (C_in, B*N), whole-batch tiles ----
    x2d = jnp.transpose(x, (1, 0, 2)).reshape(C_in, B * N)

    kernel = functools.partial(ghost_kernel, c_in=C_in)
    out2d = pl.pallas_call(
        kernel,
        out_shape=jax.ShapeDtypeStruct((c_out_p, B * N), x.dtype),
        grid_spec=pltpu.PrefetchScalarGridSpec(
            num_scalar_prefetch=0,
            grid=grid,
            in_specs=[
                pl.BlockSpec((C_in, lt), lambda i: (0, i)),
                pl.BlockSpec((c_out_p, C_in + 5), lambda i: (0, 0)),
                pl.BlockSpec((2, lt), lambda i: (0, 0)),
            ],
            out_specs=pl.BlockSpec((c_out_p, lt), lambda i: (0, i)),
        ),
        compiler_params=pltpu.CompilerParams(
            dimension_semantics=("parallel",),
            vmem_limit_bytes=vmem_limit,
        ),
    )(x2d, const, mask)

    # TODO(synk): if accuracy budget allows, keep x2d/out in bfloat16 to halve
    # HBM traffic (kept f32 here to match the f32 reference tolerance).
    return jnp.transpose(out2d[:C_in].reshape(C_in, B, N), (1, 0, 2))


def ghost_reference(x, w1, g1, be1, m1, v1, wdw, g2, be2, m2, v2, eps=1e-5):
    """Pure-JAX reference matching the PyTorch forward (inference-mode BN)."""
    x1 = jnp.einsum("oc,bcn->bon", w1, x)
    x1 = (x1 - m1[None, :, None]) * (g1 / jnp.sqrt(v1 + eps))[None, :, None] + be1[None, :, None]
    x1 = jnp.maximum(x1, 0.0)
    xp = jnp.pad(x1, ((0, 0), (0, 0), (1, 1)))
    x2 = (wdw[None, :, 0:1] * xp[:, :, :-2]
          + wdw[None, :, 1:2] * xp[:, :, 1:-1]
          + wdw[None, :, 2:3] * xp[:, :, 2:])
    x2 = (x2 - m2[None, :, None]) * (g2 / jnp.sqrt(v2 + eps))[None, :, None] + be2[None, :, None]
    x2 = jnp.maximum(x2, 0.0)
    if x2.shape[1] < x1.shape[1]:
        x2 = jnp.pad(x2, ((0, 0), (0, x1.shape[1] - x2.shape[1]), (0, 0)))
    out = jnp.concatenate([x1, x2], axis=1)
    return out[:, : x.shape[1], :]


if __name__ == "__main__":
    # GhostModule(in_channels=8, out_channels=8, ratio=2, kernel_size=1, dw_size=3)
    B, C_in, N = 2, 8, 128
    out_channels, ratio = 8, 2
    init = max(1, out_channels // ratio)       # 4
    cheap = out_channels - init                # 4
    eps = 1e-5

    key = jax.random.PRNGKey(0)
    ks = jax.random.split(key, 12)

    x = jax.random.normal(ks[0], (B, C_in, N), dtype=jnp.float32)

    # primary conv weight: (init, C_in, 1) -> squeeze kernel dim
    w1 = jax.random.normal(ks[1], (init, C_in), dtype=jnp.float32) * 0.5
    g1 = jax.random.uniform(ks[2], (init,), minval=0.5, maxval=1.5, dtype=jnp.float32)
    be1 = jax.random.normal(ks[3], (init,), dtype=jnp.float32) * 0.1
    m1 = jax.random.normal(ks[4], (init,), dtype=jnp.float32) * 0.1
    v1 = jax.random.uniform(ks[5], (init,), minval=0.5, maxval=1.5, dtype=jnp.float32)

    # cheap (depthwise) conv weight: (cheap, 1, 3) -> (cheap, 3)
    wdw = jax.random.normal(ks[6], (cheap, 3), dtype=jnp.float32) * 0.5
    g2 = jax.random.uniform(ks[7], (cheap,), minval=0.5, maxval=1.5, dtype=jnp.float32)
    be2 = jax.random.normal(ks[8], (cheap,), dtype=jnp.float32) * 0.1
    m2 = jax.random.normal(ks[9], (cheap,), dtype=jnp.float32) * 0.1
    v2 = jax.random.uniform(ks[10], (cheap,), minval=0.5, maxval=1.5, dtype=jnp.float32)

    # Fold BN into per-channel scale/shift (column vectors) for the kernel.
    s1 = (g1 / jnp.sqrt(v1 + eps)).reshape(init, 1)
    b1 = (be1 - m1 * g1 / jnp.sqrt(v1 + eps)).reshape(init, 1)
    s2 = (g2 / jnp.sqrt(v2 + eps)).reshape(cheap, 1)
    b2 = (be2 - m2 * g2 / jnp.sqrt(v2 + eps)).reshape(cheap, 1)

    out = ghost_module(x, w1, s1, b1, wdw, s2, b2)
    out = jax.block_until_ready(out)

    ref = ghost_reference(x, w1, g1, be1, m1, v1, wdw, g2, be2, m2, v2, eps=eps)
    np.testing.assert_allclose(np.asarray(out), np.asarray(ref), rtol=1e-4, atol=1e-4)

    print("KERNEL_OK")
</pallas_src>

<mosaic_0001>
module attributes {stable_mosaic.version = 11 : i64} {
  func.func @ghost_kernel(%arg0: i32, %arg1: memref<8x256xf32, #tpu.memory_space<vmem>>, %arg2: memref<8x13xf32, #tpu.memory_space<vmem>>, %arg3: memref<2x256xf32, #tpu.memory_space<vmem>>, %arg4: memref<8x256xf32, #tpu.memory_space<vmem>>) attributes {dimension_semantics = [#tpu.dimension_semantics<parallel>], iteration_bounds = array<i64: 1>, scalar_prefetch = 0 : i64, scratch_operands = 0 : i64, tpu.core_type = #tpu.core_type<tc>, window_params = [{transform_indices = @transform_0, window_bounds = array<i64: 8, 256>}, {pipeline_mode = #tpu.pipeline_mode<synchronous>, transform_indices = @transform_1, window_bounds = array<i64: 8, 13>}, {pipeline_mode = #tpu.pipeline_mode<synchronous>, transform_indices = @transform_2, window_bounds = array<i64: 2, 256>}, {transform_indices = @transform_3, window_bounds = array<i64: 8, 256>}]} {
    %c0 = arith.constant 0 : index
    %c0_0 = arith.constant 0 : index
    %0 = vector.load %arg1[%c0, %c0_0] : memref<8x256xf32, #tpu.memory_space<vmem>>, vector<8x256xf32>
    %c0_1 = arith.constant 0 : index
    %c0_2 = arith.constant 0 : index
    %1 = vector.load %arg2[%c0_1, %c0_2] : memref<8x13xf32, #tpu.memory_space<vmem>>, vector<8x13xf32>
    %2 = vector.extract_strided_slice %1 {offsets = [0, 0], sizes = [8, 8], strides = [1, 1]} : vector<8x13xf32> to vector<8x8xf32>
    %3 = vector.extract_strided_slice %1 {offsets = [0, 8], sizes = [8, 1], strides = [1, 1]} : vector<8x13xf32> to vector<8x1xf32>
    %4 = vector.extract_strided_slice %1 {offsets = [0, 9], sizes = [8, 1], strides = [1, 1]} : vector<8x13xf32> to vector<8x1xf32>
    %5 = vector.extract_strided_slice %1 {offsets = [0, 10], sizes = [8, 1], strides = [1, 1]} : vector<8x13xf32> to vector<8x1xf32>
    %6 = vector.extract_strided_slice %1 {offsets = [0, 11], sizes = [8, 1], strides = [1, 1]} : vector<8x13xf32> to vector<8x1xf32>
    %7 = vector.extract_strided_slice %1 {offsets = [0, 12], sizes = [8, 1], strides = [1, 1]} : vector<8x13xf32> to vector<8x1xf32>
    %c0_3 = arith.constant 0 : index
    %c0_4 = arith.constant 0 : index
    %8 = vector.load %arg3[%c0_3, %c0_4] : memref<2x256xf32, #tpu.memory_space<vmem>>, vector<1x256xf32>
    %c1 = arith.constant 1 : index
    %c0_5 = arith.constant 0 : index
    %9 = vector.load %arg3[%c1, %c0_5] : memref<2x256xf32, #tpu.memory_space<vmem>>, vector<1x256xf32>
    %cst = arith.constant dense<0.000000e+00> : vector<8x256xf32>
    %10 = tpu.matmul %2, %0, %cst {dimension_numbers = #tpu.dot_dimension_numbers<[1], [0], [0], [1], [0, 0, 1, 1], [], []>} : vector<8x8xf32>, vector<8x256xf32>, vector<8x256xf32> -> vector<8x256xf32>
    %11 = vector.broadcast %3 : vector<8x1xf32> to vector<8x256xf32>
    %12 = arith.addf %10, %11 : vector<8x256xf32>
    %cst_6 = arith.constant 0.000000e+00 : f32
    %13 = vector.broadcast %cst_6 : f32 to vector<8x256xf32>
    %14 = arith.maximumf %12, %13 : vector<8x256xf32>
    %c1_i32 = arith.constant 1 : i32
    %15 = tpu.dynamic_rotate %14 by %c1_i32 dim 1 : vector<8x256xf32>, i32 -> vector<8x256xf32>
    %16 = vector.broadcast %8 : vector<1x256xf32> to vector<8x256xf32>
    %17 = arith.mulf %16, %15 : vector<8x256xf32>
    %c255_i32 = arith.constant 255 : i32
    %18 = tpu.dynamic_rotate %14 by %c255_i32 dim 1 : vector<8x256xf32>, i32 -> vector<8x256xf32>
    %19 = vector.broadcast %9 : vector<1x256xf32> to vector<8x256xf32>
    %20 = arith.mulf %19, %18 : vector<8x256xf32>
    %21 = vector.broadcast %4 : vector<8x1xf32> to vector<8x256xf32>
    %22 = arith.mulf %21, %17 : vector<8x256xf32>
    %23 = vector.broadcast %5 : vector<8x1xf32> to vector<8x256xf32>
    %24 = arith.mulf %23, %14 : vector<8x256xf32>
    %25 = arith.addf %22, %24 : vector<8x256xf32>
    %26 = vector.broadcast %6 : vector<8x1xf32> to vector<8x256xf32>
    %27 = arith.mulf %26, %20 : vector<8x256xf32>
    %28 = arith.addf %25, %27 : vector<8x256xf32>
    %29 = vector.broadcast %7 : vector<8x1xf32> to vector<8x256xf32>
    %30 = arith.addf %28, %29 : vector<8x256xf32>
    %cst_7 = arith.constant 0.000000e+00 : f32
    %31 = vector.broadcast %cst_7 : f32 to vector<8x256xf32>
    %32 = arith.maximumf %30, %31 : vector<8x256xf32>
    %c0_8 = arith.constant 0 : index
    %c0_9 = arith.constant 0 : index
    %33 = vector.load %arg4[%c0_8, %c0_9] : memref<8x256xf32, #tpu.memory_space<vmem>>, vector<8x256xf32>
    tpu.vector_store %arg4[%c0_8, %c0_9], %32 {strides = array<i32>} : memref<8x256xf32, #tpu.memory_space<vmem>>, vector<8x256xf32>,
    return
  }
  func.func @transform_0(%arg0: i32) -> (i32, i32) {
    %c0_i32 = arith.constant 0 : i32
    %c0_i32_0 = arith.constant 0 : i32
    return %c0_i32, %arg0 : i32, i32
  }
  func.func @transform_1(%arg0: i32) -> (i32, i32) {
    %c0_i32 = arith.constant 0 : i32
    %c0_i32_0 = arith.constant 0 : i32
    %c0_i32_1 = arith.constant 0 : i32
    return %c0_i32, %c0_i32_0 : i32, i32
  }
  func.func @transform_2(%arg0: i32) -> (i32, i32) {
    %c0_i32 = arith.constant 0 : i32
    %c0_i32_0 = arith.constant 0 : i32
    %c0_i32_1 = arith.constant 0 : i32
    return %c0_i32, %c0_i32_0 : i32, i32
  }
  func.func @transform_3(%arg0: i32) -> (i32, i32) {
    %c0_i32 = arith.constant 0 : i32
    %c0_i32_0 = arith.constant 0 : i32
    return %c0_i32, %arg0 : i32, i32
  }
}

</mosaic_0001>

<llo_original>
// kernel: tpu_custom_call.1
$region0: #{tpu_custom_call.1}
  #allocation0 [shape = 'u32[]', space=smem, size = 0x4, offset = 0x4, fixed_abs, tag = 'smem constant byte address 0x4 - core index']
  #allocation1 [shape = 'u32[144,128]{1,0:T(1,128)}', space=vmem, size = 0x12000, scoped, tag = 'internal scratch']
  %s0 = inlined_call_operand.hbm [shape: f32[8,256], index: 0, kind: input, shape index: {}]
  %s1 = inlined_call_operand.hbm [shape: f32[8,13], index: 1, kind: input, shape index: {}]
  %s2 = inlined_call_operand.vmem [shape: f32[2,256], index: 2, kind: input, shape index: {}]
  %s3 = inlined_call_operand.hbm [shape: f32[8,256], index: 3, kind: output, shape index: {}]
  %s4 = sld [smem:[#allocation0]]
  $region30: #{tpu_custom_call.1} parent=0
    _
  %s6 = ssub.s32 1, %s4
  %s7 = scalar_select 0, %s6, %s4
  $region1: #{tpu_custom_call.1} parent=0
    #allocation2 [shape = 'u8[8192]{0}', space=vmem, size = 0x2000, scoped, tag = 'input window, operand 0, single buffered']
    #allocation3 [shape = 's32[1]{0}', space=sflag, size = 0x4, scoped, tag = 'scoped memory for tpu_custom_call.1']
    #allocation4 [shape = 's32[1]{0}', space=sflag, size = 0x4, scoped, tag = 'scoped memory for tpu_custom_call.1']
    #allocation5 [shape = 'u8[4096]{0}', space=vmem, size = 0x1000, scoped, tag = 'input window, operand 1, single buffered']
    #allocation6 [shape = 's32[1]{0}', space=sflag, size = 0x4, scoped, tag = 'scoped memory for tpu_custom_call.1']
    #allocation7 [shape = 'u8[8192]{0}', space=vmem, size = 0x2000, scoped, tag = 'output window, operand 0, single buffered']
    %8 = vsyncpa [#allocation3], 0
    %9 = vsyncpa [#allocation6], 0
    %10 = vsyncpa [#allocation4], 0
    // Predicated region
    $region2: #{tpu_custom_call.1} parent=1 // pred_check
      _
    $region3: #{tpu_custom_call.1} parent=1 // pred_check_branch
      %12 = sbr.rel (0) target = $region5
    $region4: #{tpu_custom_call.1} parent=1 // pred_region
      %s14 = ssub.s32 256, 256
      %15 = vsyncadd [#allocation3], %s14
      %s17 = sshll.u32 [#allocation2], 4
      %s18 = int_to_ptr.vmem [resolvable:$true] %s17
      %20 = dma.hbm_to_vmem [thread:$0]  %s0, 256, %s18, [#allocation3]
    $region5: #{tpu_custom_call.1} parent=1 // pred_fallthru
      _
    // Predicated region
    $region6: #{tpu_custom_call.1} parent=1 // pred_check
      _
    $region7: #{tpu_custom_call.1} parent=1 // pred_check_branch
      %22 = sbr.rel (0) target = $region9
    $region8: #{tpu_custom_call.1} parent=1 // pred_region
      %s24 = ssub.s32 128, 128
      %25 = vsyncadd [#allocation6], %s24
      %s27 = sshll.u32 [#allocation5], 4
      %s28 = int_to_ptr.vmem [resolvable:$true] %s27
      %30 = dma.hbm_to_vmem [thread:$0]  %s1, 128, %s28, [#allocation6]
    $region9: #{tpu_custom_call.1} parent=1 // pred_fallthru
      _
    // Predicated region
    $region10: #{tpu_custom_call.1} parent=1 // pred_check
      _
    $region11: #{tpu_custom_call.1} parent=1 // pred_check_branch
      %32 = sbr.rel (0) target = $region13
    $region12: #{tpu_custom_call.1} parent=1 // pred_region
      _
    $region13: #{tpu_custom_call.1} parent=1 // pred_fallthru
      _
    // Predicated region
    $region14: #{tpu_custom_call.1} parent=1 // pred_check
      _
    $region15: #{tpu_custom_call.1} parent=1 // pred_check_branch
      %34 = sbr.rel (0) target = $region17
    $region16: #{tpu_custom_call.1} parent=1 // pred_region
      %35 = dma.done [#allocation3], 256
    $region17: #{tpu_custom_call.1} parent=1 // pred_fallthru
      _
    // Predicated region
    $region18: #{tpu_custom_call.1} parent=1 // pred_check
      _
    $region19: #{tpu_custom_call.1} parent=1 // pred_check_branch
      %37 = sbr.rel (0) target = $region21
    $region20: #{tpu_custom_call.1} parent=1 // pred_region
      %38 = dma.done [#allocation6], 128
    $region21: #{tpu_custom_call.1} parent=1 // pred_fallthru
      _
    %v39 = vld [vmem:[#allocation2] sm:$0xff]
    %v40 = vld [vmem:[#allocation2 + $0x8] sm:$0xff]
    %v41 = vld [vmem:[#allocation5] sm:$0xff]
    %v42 = vld [vmem:[%s2] ss:$2 sm:$0x3]
    %s43 = scalar_lea.vmem %s2, 1
    %v44 = vld [vmem:[%s43] ss:$2 sm:$0x3]
    %46 = vset.pattern.permute.xlu0 8
    %47 = vperm.xlu0 %46, %v41
    %v48 = vpop.permute.xlu0 %47
    %vm50 = vcmask 64512
    %v51 = vsel %vm50, %v41, 0
    %53 = vmatprep.subr.mxu0 %v40
    %54 = vmatpush1.msra.mxu0 %v39
    %55 = vmatprep.subr.mxu0 0.0
    %56 = vmatpush1.msra.mxu0 0.0
    %57 = vmatprep.subr.mxu0 0.0
    %58 = vmatpush1.msra.mxu0 0.0
    %59 = vmatprep.subr.mxu0 0.0
    %60 = vmatpush1.msra.mxu0 0.0
    %61 = vmatprep.subr.mxu0 0.0
    %62 = vmatpush1.msra.mxu0 0.0
    %63 = vmatprep.subr.mxu0 0.0
    %64 = vmatpush1.msra.mxu0 0.0
    %65 = vmatprep.subr.mxu0 0.0
    %66 = vmatpush1.msra.mxu0 0.0
    %67 = vmatprep.subr.mxu0 0.0
    %68 = vmatpush1.msra.mxu0 0.0
    %69 = vmatprep.subr.mxu0 0.0
    %70 = vmatpush1.msra.mxu0 0.0
    %71 = vmatprep.subr.mxu0 0.0
    %72 = vmatpush1.msra.mxu0 0.0
    %73 = vmatprep.subr.mxu0 0.0
    %74 = vmatpush1.msra.mxu0 0.0
    %75 = vmatprep.subr.mxu0 0.0
    %76 = vmatpush1.msra.mxu0 0.0
    %77 = vmatprep.subr.mxu0 0.0
    %78 = vmatpush1.msra.mxu0 0.0
    %79 = vmatprep.subr.mxu0 0.0
    %80 = vmatpush1.msra.mxu0 0.0
    %81 = vmatprep.subr.mxu0 0.0
    %82 = vmatpush1.msra.mxu0 0.0
    %83 = vmatprep.subr.mxu0 0.0
    %84 = vmatpush1.msra.mxu0 0.0
    %85 = vmatprep.subr.mxu0 0.0
    %86 = vmatpush1.msra.mxu0 0.0
    %87 = vmatprep.subr.mxu0 0.0
    %88 = vmatpush1.msra.mxu0 0.0
    %89 = vmatprep.subr.mxu0 0.0
    %90 = vmatpush1.msra.mxu0 0.0
    %91 = vmatprep.subr.mxu0 0.0
    %92 = vmatpush1.msra.mxu0 0.0
    %93 = vmatprep.subr.mxu0 0.0
    %94 = vmatpush1.msra.mxu0 0.0
    %95 = vmatprep.subr.mxu0 0.0
    %96 = vmatpush1.msra.mxu0 0.0
    %97 = vmatprep.subr.mxu0 0.0
    %98 = vmatpush1.msra.mxu0 0.0
    %99 = vmatprep.subr.mxu0 0.0
    %100 = vmatpush1.msra.mxu0 0.0
    %101 = vmatprep.subr.mxu0 0.0
    %102 = vmatpush1.msra.mxu0 0.0
    %103 = vmatprep.subr.mxu0 0.0
    %104 = vmatpush1.msra.mxu0 0.0
    %105 = vmatprep.subr.mxu0 0.0
    %106 = vmatpush1.msra.mxu0 0.0
    %107 = vmatprep.subr.mxu0 0.0
    %108 = vmatpush1.msra.mxu0 0.0
    %109 = vmatprep.subr.mxu0 0.0
    %110 = vmatpush1.msra.mxu0 0.0
    %111 = vmatprep.subr.mxu0 0.0
    %112 = vmatpush1.msra.mxu0 0.0
    %113 = vmatprep.subr.mxu0 0.0
    %114 = vmatpush1.msra.mxu0 0.0
    %115 = vmatprep.subr.mxu0 0.0
    %116 = vmatpush1.msra.mxu0 0.0
    %117 = vmatprep.mubr.f32.mxu0 0.0
    %118 = vmatmul.mubr.f32.gmra.mrb[0].mxu0 %v51
    %v119 = vpop.f32.mrb[0].mxu0
    %v120 = vadd.f32 %v48, %v119
    %v121 = vpop.f32.mrb[0].mxu0
    %v122 = vadd.f32 %v48, %v121
    %123 = vdwg.mxu0
    %v124 = vmax.f32 %v120, 0.0
    %v125 = vmax.f32 %v122, 0.0
    %126 = vrot.lane.b32.xlu0 %v124, 1
    %v127 = vpop.permute.xlu0 %126
    %128 = vrot.lane.b32.xlu0 %v125, 1
    %v129 = vpop.permute.xlu0 %128
    %v130 = vlaneseq
    %v131 = vand.u32 %v130, 127
    %vm132 = vcmp.lt.s32.totalorder %v131, 1
    %v133 = vsel %vm132, %v127, %v129
    %v134 = vsel %vm132, %v129, %v127
    %v136 = vlaneseq
    %v137 = vshrl.u32 %v136, 7
    %v138 = vsub.s32 0, %v137
    %v139 = vrot.slane %v42, %v138
    %v140 = vlaneseq
    %v141 = vshrl.u32 %v140, 7
    %v142 = vsub.s32 1, %v141
    %v143 = vrot.slane %v42, %v142
    %v146 = vmul.f32 %v139, %v134
    %v147 = vmul.f32 %v143, %v133
    %148 = vrot.lane.b32.xlu0 %v124, 127
    %v149 = vpop.permute.xlu0 %148
    %150 = vrot.lane.b32.xlu0 %v125, 127
    %v151 = vpop.permute.xlu0 %150
    %vm152 = vcmp.lt.s32.totalorder %v131, 127
    %v153 = vsel %vm152, %v149, %v151
    %v154 = vsel %vm152, %v151, %v149
    %v156 = vlaneseq
    %v157 = vshrl.u32 %v156, 7
    %v158 = vsub.s32 0, %v157
    %v159 = vrot.slane %v44, %v158
    %v160 = vlaneseq
    %v161 = vshrl.u32 %v160, 7
    %v162 = vsub.s32 1, %v161
    %v163 = vrot.slane %v44, %v162
    %v166 = vmul.f32 %v159, %v153
    %v167 = vmul.f32 %v163, %v154
    %168 = vset.pattern.permute.xlu0 9
    %169 = vperm.xlu0 %168, %v41
    %v170 = vpop.permute.xlu0 %169
    %v172 = vmul.f32 %v170, %v146
    %v173 = vmul.f32 %v170, %v147
    %174 = vset.pattern.permute.xlu0 10
    %175 = vperm.xlu0 %174, %v41
    %v176 = vpop.permute.xlu0 %175
    %v178 = vmul.f32 %v176, %v124
    %v179 = vmul.f32 %v176, %v125
    %v180 = vadd.f32 %v172, %v178
    %v181 = vadd.f32 %v173, %v179
    %182 = vset.pattern.permute.xlu0 11
    %183 = vperm.xlu0 %182, %v41
    %v184 = vpop.permute.xlu0 %183
    %v186 = vmul.f32 %v184, %v166
    %v187 = vmul.f32 %v184, %v167
    %v188 = vadd.f32 %v180, %v186
    %v189 = vadd.f32 %v181, %v187
    %190 = vset.pattern.permute.xlu0 12
    %191 = vperm.xlu0 %190, %v41
    %v192 = vpop.permute.xlu0 %191
    %v194 = vadd.f32 %v188, %v192
    %v195 = vadd.f32 %v189, %v192
    %v196 = vmax.f32 %v194, 0.0
    %v197 = vmax.f32 %v195, 0.0
    %198 = vst [vmem:[#allocation7] sm:$0xff] %v196
    %199 = vst [vmem:[#allocation7 + $0x8] sm:$0xff] %v197
    // Predicated region
    $region22: #{tpu_custom_call.1} parent=1 // pred_check
      _
    $region23: #{tpu_custom_call.1} parent=1 // pred_check_branch
      %201 = sbr.rel (0) target = $region25
    $region24: #{tpu_custom_call.1} parent=1 // pred_region
      %s203 = ssub.s32 256, 256
      %204 = vsyncadd [#allocation4], %s203
      %s206 = sshll.u32 [#allocation7], 4
      %s207 = int_to_ptr.vmem [resolvable:$true] %s206
      %209 = dma.vmem_to_hbm [thread:$0]  %s207, 256, %s3, [#allocation4]
    $region25: #{tpu_custom_call.1} parent=1 // pred_fallthru
      _
    // Predicated region
    $region26: #{tpu_custom_call.1} parent=1 // pred_check
      _
    $region27: #{tpu_custom_call.1} parent=1 // pred_check_branch
      %211 = sbr.rel (0) target = $region29
    $region28: #{tpu_custom_call.1} parent=1 // pred_region
      %212 = dma.done [#allocation4], 256
    $region29: #{tpu_custom_call.1} parent=1 // pred_fallthru
      _
    %213 = vsyncpa [#allocation3], 1
    %214 = vsyncpa [#allocation6], 1
    %215 = vsyncpa [#allocation4], 1

</llo_original>
